<compile_context>
chip_gen: v6e
topology: v6e:2x2x1
jax: 0.10.0
libtpu: 0.0.40
codegen_flags: <defaults>
</compile_context>

<pallas_src>
import functools

import jax
import jax.numpy as jnp
from jax.experimental import pallas as pl
from jax.experimental.pallas import tpu as pltpu

EPS = 1e-5


def _round_up(x, m):
    return (x + m - 1) // m * m


def _adain_kernel(wb_ref, x_ref, o_ref, *, rows, l_true, l_pad, eps):
    # wb_ref: (n_pad, 2) resident gamma/beta;  x_ref / o_ref: (rows, l_pad) tile.
    i = pl.program_id(0)
    r0 = pl.multiple_of(i * rows, 8)
    wb = wb_ref[pl.ds(r0, rows), :]                         # (rows, 2) f32
    gamma = wb[:, 0:1]
    beta = wb[:, 1:2]

    x = x_ref[...].astype(jnp.float32)                      # (rows, l_pad)
    inv_n = jnp.float32(1.0 / l_true)
    mean = jnp.sum(x, axis=-1, keepdims=True) * inv_n       # pad lanes are zero
    centered = x - mean
    if l_pad == l_true:
        var = jnp.sum(centered * centered, axis=-1, keepdims=True) * inv_n
    else:
        # Exclude padded lanes from the variance (they would add mean^2 each).
        lane = jax.lax.broadcasted_iota(jnp.int32, (1, l_pad), 1)
        masked = jnp.where(lane < l_true, centered, 0.0)
        var = jnp.sum(masked * masked, axis=-1, keepdims=True) * inv_n
    scale = gamma * jax.lax.rsqrt(var + eps)                # (rows, 1)
    o_ref[...] = (centered * scale + beta).astype(o_ref.dtype)


def _choose_rows(n_pad, live_bytes_per_row, x_bytes_per_row, total_budget,
                 x_tile_budget):
    """Largest multiple-of-8 divisor of n_pad whose tile fits both the total
    live-VMEM budget and the x-tile budget; prefers an even grid-step count so
    v7x's two TensorCores split the work evenly (no effect on v5e/v6e)."""
    cap = min(total_budget // max(live_bytes_per_row, 1),
              x_tile_budget // max(x_bytes_per_row, 1))
    cands = [r for r in range(8, n_pad + 1, 8)
             if n_pad % r == 0 and r <= cap]
    if not cands:
        # TODO(synk): very large H*W would need an L-split two-pass reduction;
        # fall back to the minimum legal 8-row tile and the raised VMEM limit.
        return 8
    even = [r for r in cands if (n_pad // r) % 2 == 0]
    return max(even) if even else max(cands)


def adaptive_batch_norm_2d(x, weight, bias, eps=EPS):
    """x: (B, C, H, W); weight, bias: (B*C,). Returns (B, C, H, W)."""
    B, C, H, W = x.shape
    N, L = B * C, H * W
    dsize = jnp.dtype(x.dtype).itemsize

    n_pad = _round_up(max(N, 1), 8)
    l_pad = _round_up(max(L, 1), 128)

    x2 = x.reshape(N, L)                                    # lane-dense 2D view
    if (n_pad, l_pad) != (N, L):
        x2 = jnp.pad(x2, ((0, n_pad - N), (0, l_pad - L)))

    wb = jnp.stack([weight.astype(jnp.float32),
                    bias.astype(jnp.float32)], axis=-1)     # (N, 2)
    if n_pad != N:
        wb = jnp.pad(wb, ((0, n_pad - N), (0, 0)))

    # --- VMEM budgeting: count everything that is live per grid step. -------
    try:
        vmem_cap = int(pltpu.get_tpu_info().vmem_capacity_bytes)
    except Exception:                                       # pragma: no cover
        vmem_cap = 64 << 20                                 # v7x per-TC floor
    x_row = l_pad * dsize
    # 2x double-buffered input + 2x double-buffered output + ~2 f32 tile temps
    live_row = 2 * x_row + 2 * x_row + 2 * l_pad * 4
    wb_vmem = n_pad * 128 * 4                               # (8,128)-tiled resident copy
    total_budget = max(int(0.45 * vmem_cap) - wb_vmem, live_row)
    rows = _choose_rows(n_pad, live_row, x_row, total_budget, 12 << 20)
    grid = (n_pad // rows,)

    live_bytes = rows * live_row + wb_vmem
    vmem_limit = max(32 << 20,
                     min(vmem_cap - (8 << 20), int(live_bytes * 1.25)))

    cost = pl.CostEstimate(
        flops=7 * N * L,                  # sum, center, square, sum, scale, mul, add
        transcendentals=N,                # one rsqrt per (b, c) row
        bytes_accessed=2 * n_pad * l_pad * dsize + n_pad * 8,
    )

    kernel = functools.partial(_adain_kernel, rows=rows, l_true=L,
                               l_pad=l_pad, eps=eps)

    out2 = pl.pallas_call(
        kernel,
        out_shape=jax.ShapeDtypeStruct((n_pad, l_pad), x.dtype),
        grid=grid,
        in_specs=[
            pl.BlockSpec((n_pad, 2), lambda i: (0, 0)),     # resident gamma/beta
            pl.BlockSpec((rows, l_pad), lambda i: (i, 0)),  # x row tile
        ],
        out_specs=pl.BlockSpec((rows, l_pad), lambda i: (i, 0)),
        compiler_params=pltpu.CompilerParams(
            dimension_semantics=("parallel",),
            vmem_limit_bytes=vmem_limit,
        ),
        cost_estimate=cost,
    )(wb, x2)
    return out2[:N, :L].reshape(B, C, H, W)


def _reference(x, weight, bias):
    B, C, H, W = x.shape
    xf = x.astype(jnp.float32)
    mean = jnp.mean(xf, axis=(2, 3), keepdims=True)
    var = jnp.mean((xf - mean) ** 2, axis=(2, 3), keepdims=True)
    gamma = weight.reshape(B, C, 1, 1)
    beta = bias.reshape(B, C, 1, 1)
    return ((xf - mean) * jax.lax.rsqrt(var + EPS) * gamma + beta).astype(x.dtype)


if __name__ == "__main__":
    key = jax.random.PRNGKey(0)
    kx, kw, kb = jax.random.split(key, 3)

    B, C, H, W = 2, 4, 16, 16
    x = jax.random.normal(kx, (B, C, H, W), dtype=jnp.float32)

    # In the PyTorch module, weight/bias (shape B*C) are assigned externally
    # before forward; initialize them deterministically here.
    weight = jax.random.normal(kw, (B * C,), dtype=jnp.float32)
    bias = jax.random.normal(kb, (B * C,), dtype=jnp.float32)

    out = adaptive_batch_norm_2d(x, weight, bias)
    out = jax.block_until_ready(out)

    ref = _reference(x, weight, bias)
    assert out.shape == (B, C, H, W)
    assert jnp.allclose(out, ref, atol=1e-4, rtol=1e-4)

    print("KERNEL_OK")
</pallas_src>

<mosaic_0001>
module attributes {stable_mosaic.version = 11 : i64} {
  func.func @_adain_kernel(%arg0: i32, %arg1: memref<8x2xf32, #tpu.memory_space<vmem>>, %arg2: memref<8x256xf32, #tpu.memory_space<vmem>>, %arg3: memref<8x256xf32, #tpu.memory_space<vmem>>) attributes {dimension_semantics = [#tpu.dimension_semantics<parallel>], iteration_bounds = array<i64: 1>, scalar_prefetch = 0 : i64, scratch_operands = 0 : i64, tpu.core_type = #tpu.core_type<tc>, window_params = [{pipeline_mode = #tpu.pipeline_mode<synchronous>, transform_indices = @transform_0, window_bounds = array<i64: 8, 2>}, {transform_indices = @transform_1, window_bounds = array<i64: 8, 256>}, {transform_indices = @transform_2, window_bounds = array<i64: 8, 256>}]} {
    %c8_i32 = arith.constant 8 : i32
    %0 = arith.muli %arg0, %c8_i32 : i32
    %1 = tpu.assume_multiple %0, 8 : i32
    %2 = arith.index_cast %1 : i32 to index
    %c0 = arith.constant 0 : index
    %3 = vector.load %arg1[%2, %c0] : memref<8x2xf32, #tpu.memory_space<vmem>>, vector<8x2xf32>
    %4 = vector.extract_strided_slice %3 {offsets = [0, 0], sizes = [8, 1], strides = [1, 1]} : vector<8x2xf32> to vector<8x1xf32>
    %5 = vector.extract_strided_slice %3 {offsets = [0, 1], sizes = [8, 1], strides = [1, 1]} : vector<8x2xf32> to vector<8x1xf32>
    %c0_0 = arith.constant 0 : index
    %c0_1 = arith.constant 0 : index
    %6 = vector.load %arg2[%c0_0, %c0_1] : memref<8x256xf32, #tpu.memory_space<vmem>>, vector<8x256xf32>
    %cst = arith.constant dense<0.000000e+00> : vector<8xf32>
    %7 = vector.multi_reduction <add>, %6, %cst [1] : vector<8x256xf32> to vector<8xf32>
    %8 = vector.shape_cast %7 : vector<8xf32> to vector<8x1xf32>
    %cst_2 = arith.constant 3.906250e-03 : f32
    %9 = vector.broadcast %cst_2 : f32 to vector<8x1xf32>
    %10 = arith.mulf %8, %9 : vector<8x1xf32>
    %11 = vector.broadcast %10 : vector<8x1xf32> to vector<8x256xf32>
    %12 = arith.subf %6, %11 : vector<8x256xf32>
    %13 = arith.mulf %12, %12 : vector<8x256xf32>
    %cst_3 = arith.constant dense<0.000000e+00> : vector<8xf32>
    %14 = vector.multi_reduction <add>, %13, %cst_3 [1] : vector<8x256xf32> to vector<8xf32>
    %15 = vector.shape_cast %14 : vector<8xf32> to vector<8x1xf32>
    %cst_4 = arith.constant 3.906250e-03 : f32
    %16 = vector.broadcast %cst_4 : f32 to vector<8x1xf32>
    %17 = arith.mulf %15, %16 : vector<8x1xf32>
    %cst_5 = arith.constant 9.99999974E-6 : f32
    %18 = vector.broadcast %cst_5 : f32 to vector<8x1xf32>
    %19 = arith.addf %17, %18 : vector<8x1xf32>
    %20 = math.rsqrt %19 : vector<8x1xf32>
    %21 = arith.mulf %4, %20 : vector<8x1xf32>
    %22 = vector.broadcast %21 : vector<8x1xf32> to vector<8x256xf32>
    %23 = arith.mulf %12, %22 : vector<8x256xf32>
    %24 = vector.broadcast %5 : vector<8x1xf32> to vector<8x256xf32>
    %25 = arith.addf %23, %24 : vector<8x256xf32>
    %c0_6 = arith.constant 0 : index
    %c0_7 = arith.constant 0 : index
    %26 = vector.load %arg3[%c0_6, %c0_7] : memref<8x256xf32, #tpu.memory_space<vmem>>, vector<8x256xf32>
    tpu.vector_store %arg3[%c0_6, %c0_7], %25 {strides = array<i32>} : memref<8x256xf32, #tpu.memory_space<vmem>>, vector<8x256xf32>,
    return
  }
  func.func @transform_0(%arg0: i32) -> (i32, i32) {
    %c0_i32 = arith.constant 0 : i32
    %c0_i32_0 = arith.constant 0 : i32
    %c0_i32_1 = arith.constant 0 : i32
    return %c0_i32, %c0_i32_0 : i32, i32
  }
  func.func @transform_1(%arg0: i32) -> (i32, i32) {
    %c0_i32 = arith.constant 0 : i32
    %c0_i32_0 = arith.constant 0 : i32
    return %arg0, %c0_i32 : i32, i32
  }
  func.func @transform_2(%arg0: i32) -> (i32, i32) {
    %c0_i32 = arith.constant 0 : i32
    %c0_i32_0 = arith.constant 0 : i32
    return %arg0, %c0_i32 : i32, i32
  }
}

</mosaic_0001>

<llo_original>
// kernel: tpu_custom_call.1
$region0: #{tpu_custom_call.1}
  #allocation0 [shape = 'u32[]', space=smem, size = 0x4, offset = 0x4, fixed_abs, tag = 'smem constant byte address 0x4 - core index']
  #allocation1 [shape = 'u32[144,128]{1,0:T(1,128)}', space=vmem, size = 0x12000, scoped, tag = 'internal scratch']
  %s0 = inlined_call_operand.vmem [shape: f32[8,2], index: 0, kind: input, shape index: {}]
  %s1 = inlined_call_operand.hbm [shape: f32[8,256], index: 1, kind: input, shape index: {}]
  %s2 = inlined_call_operand.hbm [shape: f32[8,256], index: 2, kind: output, shape index: {}]
  %s3 = sld [smem:[#allocation0]]
  $region22: #{tpu_custom_call.1} parent=0
    _
  %s5 = ssub.s32 1, %s3
  %s6 = scalar_select 0, %s5, %s3
  $region1: #{tpu_custom_call.1} parent=0
    #allocation2 [shape = 'u8[8192]{0}', space=vmem, size = 0x2000, scoped, tag = 'input window, operand 1, single buffered']
    #allocation3 [shape = 's32[1]{0}', space=sflag, size = 0x4, scoped, tag = 'scoped memory for tpu_custom_call.1']
    #allocation4 [shape = 's32[1]{0}', space=sflag, size = 0x4, scoped, tag = 'scoped memory for tpu_custom_call.1']
    #allocation5 [shape = 'u8[8192]{0}', space=vmem, size = 0x2000, scoped, tag = 'output window, operand 0, single buffered']
    %7 = vsyncpa [#allocation3], 0
    %8 = vsyncpa [#allocation4], 0
    // Predicated region
    $region2: #{tpu_custom_call.1} parent=1 // pred_check
      _
    $region3: #{tpu_custom_call.1} parent=1 // pred_check_branch
      %10 = sbr.rel (0) target = $region5
    $region4: #{tpu_custom_call.1} parent=1 // pred_region
      _
    $region5: #{tpu_custom_call.1} parent=1 // pred_fallthru
      _
    // Predicated region
    $region6: #{tpu_custom_call.1} parent=1 // pred_check
      _
    $region7: #{tpu_custom_call.1} parent=1 // pred_check_branch
      %12 = sbr.rel (0) target = $region9
    $region8: #{tpu_custom_call.1} parent=1 // pred_region
      %s14 = ssub.s32 256, 256
      %15 = vsyncadd [#allocation3], %s14
      %s17 = sshll.u32 [#allocation2], 4
      %s18 = int_to_ptr.vmem [resolvable:$true] %s17
      %20 = dma.hbm_to_vmem [thread:$0]  %s1, 256, %s18, [#allocation3]
    $region9: #{tpu_custom_call.1} parent=1 // pred_fallthru
      _
    // Predicated region
    $region10: #{tpu_custom_call.1} parent=1 // pred_check
      _
    $region11: #{tpu_custom_call.1} parent=1 // pred_check_branch
      %22 = sbr.rel (0) target = $region13
    $region12: #{tpu_custom_call.1} parent=1 // pred_region
      %23 = dma.done [#allocation3], 256
    $region13: #{tpu_custom_call.1} parent=1 // pred_fallthru
      _
    %s24 = smul.u32 0, 8
    %s25 = scalar_lea.vmem %s0, %s24
    %v26 = vld [vmem:[%s25] sm:$0xff]
    %v27 = vld [vmem:[#allocation2] sm:$0xff]
    %v28 = vld [vmem:[#allocation2 + $0x8] sm:$0xff]
    %v29 = vadd.f32 %v27, %v28
    %30 = vadd.xlane.f32.xlu0 %v29
    %v31 = vpop.xlane.xlu0 %30
    %v32 = vmul.f32 %v31, 0.00390625
    %v33 = vsub.f32 %v27, %v32
    %v34 = vsub.f32 %v28, %v32
    %v35 = vmul.f32 %v33, %v33
    %v36 = vmul.f32 %v34, %v34
    %v37 = vadd.f32 %v35, %v36
    %38 = vadd.xlane.f32.xlu0 %v37
    %v39 = vpop.xlane.xlu0 %38
    %v40 = vmul.f32 %v39, 0.00390625
    %v41 = vadd.f32 %v40, 1e-05
    %v42 = vrsqrt.pop %v41
    %v43 = vmul.f32 %v26, %v42
    %45 = vset.pattern.permute.xlu0 0
    %46 = vperm.xlu0 %45, %v43
    %v47 = vpop.permute.xlu0 %46
    %v49 = vmul.f32 %v33, %v47
    %v50 = vmul.f32 %v34, %v47
    %52 = vset.pattern.permute.xlu0 1
    %53 = vperm.xlu0 %52, %v26
    %v54 = vpop.permute.xlu0 %53
    %v56 = vadd.f32 %v49, %v54
    %v57 = vadd.f32 %v50, %v54
    %58 = vst [vmem:[#allocation5] sm:$0xff] %v56
    %59 = vst [vmem:[#allocation5 + $0x8] sm:$0xff] %v57
    // Predicated region
    $region14: #{tpu_custom_call.1} parent=1 // pred_check
      _
    $region15: #{tpu_custom_call.1} parent=1 // pred_check_branch
      %61 = sbr.rel (0) target = $region17
    $region16: #{tpu_custom_call.1} parent=1 // pred_region
      %s63 = ssub.s32 256, 256
      %64 = vsyncadd [#allocation4], %s63
      %s66 = sshll.u32 [#allocation5], 4
      %s67 = int_to_ptr.vmem [resolvable:$true] %s66
      %69 = dma.vmem_to_hbm [thread:$0]  %s67, 256, %s2, [#allocation4]
    $region17: #{tpu_custom_call.1} parent=1 // pred_fallthru
      _
    // Predicated region
    $region18: #{tpu_custom_call.1} parent=1 // pred_check
      _
    $region19: #{tpu_custom_call.1} parent=1 // pred_check_branch
      %71 = sbr.rel (0) target = $region21
    $region20: #{tpu_custom_call.1} parent=1 // pred_region
      %72 = dma.done [#allocation4], 256
    $region21: #{tpu_custom_call.1} parent=1 // pred_fallthru
      _
    %73 = vsyncpa [#allocation3], 1
    %74 = vsyncpa [#allocation4], 1

</llo_original>
